<compile_context>
chip_gen: v7x
topology: tpu7x:2x2x1
jax: 0.10.0
libtpu: 0.0.40
codegen_flags: <defaults>
</compile_context>

<pallas_src>
import functools

import jax
import jax.numpy as jnp
from jax.experimental import pallas as pl
from jax.experimental.pallas import tpu as pltpu

LANE = 128
SUBLANE = 8


def _round_up(n, m):
    return ((n + m - 1) // m) * m


def _pad2(a, rows, cols):
    return jnp.pad(a, ((0, rows - a.shape[0]), (0, cols - a.shape[1])))


def _choose_batch_tile(batch):
    """Large tiles, >=2 grid steps when possible, minimal batch padding."""
    if batch <= 16:
        return _round_up(max(batch, 1), SUBLANE)
    target = 1024
    n_steps = max(2, -(-batch // target))
    return _round_up(-(-batch // n_steps), 16)


def nbvae_kernel(*refs, lp, hd_pad, has_dropout):
    if has_dropout:
        (x_ref, eps_ref, mask_ref,
         ew0_ref, eb0_ref, ewml_ref, ebml_ref,
         wrp0_ref, brp0_ref, rw1_ref, rb1_ref, pw1_ref, pb1_ref,
         hr_ref, hp_ref, kl_ref) = refs
    else:
        mask_ref = None
        (x_ref, eps_ref,
         ew0_ref, eb0_ref, ewml_ref, ebml_ref,
         wrp0_ref, brp0_ref, rw1_ref, rb1_ref, pw1_ref, pb1_ref,
         hr_ref, hp_ref, kl_ref) = refs

    x = x_ref[...]                                            # (tb, dp) f32

    # nn.functional.normalize(x, p=2, dim=1): x / max(||x||_2, 1e-12)
    sumsq = jnp.sum(x * x, axis=1, keepdims=True)
    h = x * jax.lax.rsqrt(jnp.maximum(sumsq, 1e-24))

    hb = h.astype(jnp.bfloat16)
    if has_dropout:                                           # static branch
        # Bernoulli(keep_prob) mask; the 1/keep scale is folded into ew0.
        hb = hb * mask_ref[...]

    # --- encoder --------------------------------------------------------
    h1 = jnp.tanh(jnp.dot(hb, ew0_ref[...],
                          preferred_element_type=jnp.float32) + eb0_ref[...])

    # fused [mu | logvar] matmul, split at the 128-aligned lp boundary
    ml = (jnp.dot(h1.astype(jnp.bfloat16), ewml_ref[...],
                  preferred_element_type=jnp.float32) + ebml_ref[...])
    mu_z = ml[:, :lp]
    logvar_q = ml[:, lp:]
    std_z = jnp.exp(0.5 * logvar_q)
    # exp(logvar_q) == std_z * std_z -> one fewer EUP exp per block.
    kl_ref[...] = jnp.sum(
        0.5 * (-logvar_q + std_z * std_z + mu_z * mu_z - 1.0),
        axis=1, keepdims=True)

    # --- reparameterization (eps pre-scaled by is_training on host) ------
    z = (mu_z + eps_ref[...].astype(jnp.float32) * std_z).astype(jnp.bfloat16)

    # --- fused decoder-0: z @ [rw0 | pw0], split at aligned boundary -----
    h0 = jnp.tanh(jnp.dot(z, wrp0_ref[...],
                          preferred_element_type=jnp.float32) + brp0_ref[...])
    hr_hid = h0[:, :hd_pad].astype(jnp.bfloat16)
    hp_hid = h0[:, hd_pad:].astype(jnp.bfloat16)

    hr_ref[...] = (jnp.dot(hr_hid, rw1_ref[...],
                           preferred_element_type=jnp.float32) + rb1_ref[...])
    hp_ref[...] = (jnp.dot(hp_hid, pw1_ref[...],
                           preferred_element_type=jnp.float32) + pb1_ref[...])


def construct_weights(architecture, key):
    """Mirrors NegativeBinomialVAE._construct_weights deterministically."""
    weights, biases = [], []
    for d_in, d_out in zip(architecture[:-1], architecture[1:]):
        key, kw, kb = jax.random.split(key, 3)
        bound = (6.0 / (d_in + d_out)) ** 0.5                 # xavier_uniform_
        weights.append(
            jax.random.uniform(kw, (d_in, d_out), jnp.float32, -bound, bound))
        biases.append(
            jax.random.normal(kb, (d_out,), jnp.float32) * 0.001)  # std=0.001
    return weights, biases


def make_params(arch, key):
    decoder_arch = list(arch[::-1])
    decoder_arch[0] = decoder_arch[0] // 2
    k_e, k_r, k_p = jax.random.split(key, 3)
    enc_w, enc_b = construct_weights(arch, k_e)
    dec_r_w, dec_r_b = construct_weights(decoder_arch, k_r)
    dec_p_w, dec_p_b = construct_weights(decoder_arch, k_p)
    return enc_w, enc_b, dec_r_w, dec_r_b, dec_p_w, dec_p_b


def pack_params(params, keep_prob):
    """One-time (outside jit) padding + bf16 cast of all weights/biases."""
    enc_w, enc_b, dec_r_w, dec_r_b, dec_p_w, dec_p_b = params
    # TODO(synk): kernel hard-codes a 3-entry arch (2-layer encoder/decoders);
    # deeper architectures would need a loop of matmuls in the kernel.
    assert len(enc_w) == 2 and len(dec_r_w) == 2 and len(dec_p_w) == 2

    d_in, hid = enc_w[0].shape
    latent = enc_w[1].shape[1] // 2
    d_hid_dec = dec_r_w[0].shape[1]
    d_out = dec_r_w[1].shape[1]

    dp = _round_up(d_in, LANE)
    hp_ = _round_up(hid, LANE)
    lp = _round_up(latent, LANE)
    hdp = _round_up(d_hid_dec, LANE)
    dop = _round_up(d_out, LANE)

    inv_keep = (1.0 / float(keep_prob)) if keep_prob < 1.0 else 1.0
    bf = jnp.bfloat16

    # (mask*h/keep) @ W == (mask*h) @ (W/keep): fold the dropout scale here.
    ew0 = _pad2(enc_w[0] * jnp.float32(inv_keep), dp, hp_).astype(bf)
    eb0 = _pad2(enc_b[0].reshape(1, -1), 1, hp_)
    ewml = jnp.concatenate(
        [_pad2(enc_w[1][:, :latent], hp_, lp),
         _pad2(enc_w[1][:, latent:], hp_, lp)], axis=1).astype(bf)
    ebml = jnp.concatenate(
        [_pad2(enc_b[1][:latent].reshape(1, -1), 1, lp),
         _pad2(enc_b[1][latent:].reshape(1, -1), 1, lp)], axis=1)

    wrp0 = jnp.concatenate(
        [_pad2(dec_r_w[0], lp, hdp), _pad2(dec_p_w[0], lp, hdp)],
        axis=1).astype(bf)
    brp0 = jnp.concatenate(
        [_pad2(dec_r_b[0].reshape(1, -1), 1, hdp),
         _pad2(dec_p_b[0].reshape(1, -1), 1, hdp)], axis=1)
    rw1 = _pad2(dec_r_w[1], hdp, dop).astype(bf)
    rb1 = _pad2(dec_r_b[1].reshape(1, -1), 1, dop)
    pw1 = _pad2(dec_p_w[1], hdp, dop).astype(bf)
    pb1 = _pad2(dec_p_b[1].reshape(1, -1), 1, dop)

    packed = (ew0, eb0, ewml, ebml, wrp0, brp0, rw1, rb1, pw1, pb1)
    dims = dict(d_in=d_in, latent=latent, d_out=d_out,
                dp=dp, hp=hp_, lp=lp, hdp=hdp, dop=dop)
    return packed, dims


def make_nbvae_forward(dims, keep_prob):
    d_in, latent, d_out = dims["d_in"], dims["latent"], dims["d_out"]
    dp, lp, hdp, dop = dims["dp"], dims["lp"], dims["hdp"], dims["dop"]
    has_dropout = keep_prob < 1.0

    kernel = functools.partial(nbvae_kernel, lp=lp, hd_pad=hdp,
                               has_dropout=has_dropout)

    @jax.jit
    def forward(x, is_training_ph, rng, packed):
        batch = x.shape[0]
        tb = _choose_batch_tile(batch)
        bp = _round_up(batch, tb)
        grid = (bp // tb,)

        k_eps, k_drop = jax.random.split(rng)
        # Exact despite padding: padded latent rows of wrp0 are zero, so the
        # values in eps's padded lanes/rows never reach the outputs.
        eps = (jax.random.normal(k_eps, (bp, lp), jnp.float32)
               * is_training_ph).astype(jnp.bfloat16)

        x_p = x.astype(jnp.float32)
        if (bp, dp) != (batch, d_in):
            x_p = jnp.pad(x_p, ((0, bp - batch), (0, dp - d_in)))

        def tile(shape):
            return pl.BlockSpec(shape, lambda i: (i, 0))

        def resident(shape):
            return pl.BlockSpec(shape, lambda i: (0, 0))

        args = [x_p, eps]
        in_specs = [tile((tb, dp)), tile((tb, lp))]
        if has_dropout:
            mask = jax.random.bernoulli(
                k_drop, keep_prob, (bp, dp)).astype(jnp.bfloat16)
            args.append(mask)
            in_specs.append(tile((tb, dp)))
        for w in packed:
            args.append(w)
            in_specs.append(resident(w.shape))

        out_specs = (
            tile((tb, dop)),                       # h_r
            tile((tb, dop)),                       # h_p
            tile((tb, 1)),                         # kl (tiny; keep simple)
        )

        hr, hp, kl = pl.pallas_call(
            kernel,
            out_shape=(
                jax.ShapeDtypeStruct((bp, dop), jnp.float32),
                jax.ShapeDtypeStruct((bp, dop), jnp.float32),
                jax.ShapeDtypeStruct((bp, 1), jnp.float32),
            ),
            grid_spec=pltpu.PrefetchScalarGridSpec(
                num_scalar_prefetch=0,
                grid=grid,
                in_specs=in_specs,
                out_specs=out_specs,
            ),
            compiler_params=pltpu.CompilerParams(
                dimension_semantics=("parallel",),
            ),
        )(*args)

        # strip padding; kl matches torch shape (B,)
        return hr[:batch, :d_out], hp[:batch, :d_out], kl[:batch, 0]

    return forward


if __name__ == "__main__":
    # Small shapes consistent with the MLP arch: input=128, hidden=64,
    # encoder output=32 -> latent=16.  Batch=8.
    arch = [128, 64, 32]
    batch = 8

    root = jax.random.PRNGKey(0)
    k_param, k_data, k_fwd = jax.random.split(root, 3)

    params = make_params(arch, k_param)
    x = jax.random.uniform(k_data, (batch, arch[0]), jnp.float32)

    keep_prob = 0.75       # dropout p = 1 - keep_prob (training=True in torch)
    is_training = 1.0      # reparameterization noise on
    # anneal_ph only affects negative_elbo_loss, not forward().

    packed, dims = pack_params(params, keep_prob)
    forward = make_nbvae_forward(dims, keep_prob)

    h_r, h_p, kl = forward(x, is_training, k_fwd, packed)
    jax.block_until_ready((h_r, h_p, kl))

    assert h_r.shape == (batch, arch[0])
    assert h_p.shape == (batch, arch[0])
    assert kl.shape == (batch,)
    assert bool(jnp.all(jnp.isfinite(h_r)))
    assert bool(jnp.all(jnp.isfinite(h_p)))
    assert bool(jnp.all(jnp.isfinite(kl)))
    print("KERNEL_OK")
</pallas_src>

<mosaic_0001>
module attributes {stable_mosaic.version = 11 : i64} {
  func.func @nbvae_kernel(%arg0: i32, %arg1: memref<8x128xf32, #tpu.memory_space<vmem>>, %arg2: memref<8x128xbf16, #tpu.memory_space<vmem>>, %arg3: memref<8x128xbf16, #tpu.memory_space<vmem>>, %arg4: memref<128x128xbf16, #tpu.memory_space<vmem>>, %arg5: memref<1x128xf32, #tpu.memory_space<vmem>>, %arg6: memref<128x256xbf16, #tpu.memory_space<vmem>>, %arg7: memref<1x256xf32, #tpu.memory_space<vmem>>, %arg8: memref<128x256xbf16, #tpu.memory_space<vmem>>, %arg9: memref<1x256xf32, #tpu.memory_space<vmem>>, %arg10: memref<128x128xbf16, #tpu.memory_space<vmem>>, %arg11: memref<1x128xf32, #tpu.memory_space<vmem>>, %arg12: memref<128x128xbf16, #tpu.memory_space<vmem>>, %arg13: memref<1x128xf32, #tpu.memory_space<vmem>>, %arg14: memref<8x128xf32, #tpu.memory_space<vmem>>, %arg15: memref<8x128xf32, #tpu.memory_space<vmem>>, %arg16: memref<8x1xf32, #tpu.memory_space<vmem>>) attributes {dimension_semantics = [#tpu.dimension_semantics<parallel>], iteration_bounds = array<i64: 1>, scalar_prefetch = 0 : i64, scratch_operands = 0 : i64, tpu.core_type = #tpu.core_type<tc>, window_params = [{transform_indices = @transform_0, window_bounds = array<i64: 8, 128>}, {transform_indices = @transform_1, window_bounds = array<i64: 8, 128>}, {transform_indices = @transform_2, window_bounds = array<i64: 8, 128>}, {pipeline_mode = #tpu.pipeline_mode<synchronous>, transform_indices = @transform_3, window_bounds = array<i64: 128, 128>}, {pipeline_mode = #tpu.pipeline_mode<synchronous>, transform_indices = @transform_4, window_bounds = array<i64: 1, 128>}, {pipeline_mode = #tpu.pipeline_mode<synchronous>, transform_indices = @transform_5, window_bounds = array<i64: 128, 256>}, {pipeline_mode = #tpu.pipeline_mode<synchronous>, transform_indices = @transform_6, window_bounds = array<i64: 1, 256>}, {pipeline_mode = #tpu.pipeline_mode<synchronous>, transform_indices = @transform_7, window_bounds = array<i64: 128, 256>}, {pipeline_mode = #tpu.pipeline_mode<synchronous>, transform_indices = @transform_8, window_bounds = array<i64: 1, 256>}, {pipeline_mode = #tpu.pipeline_mode<synchronous>, transform_indices = @transform_9, window_bounds = array<i64: 128, 128>}, {pipeline_mode = #tpu.pipeline_mode<synchronous>, transform_indices = @transform_10, window_bounds = array<i64: 1, 128>}, {pipeline_mode = #tpu.pipeline_mode<synchronous>, transform_indices = @transform_11, window_bounds = array<i64: 128, 128>}, {pipeline_mode = #tpu.pipeline_mode<synchronous>, transform_indices = @transform_12, window_bounds = array<i64: 1, 128>}, {transform_indices = @transform_13, window_bounds = array<i64: 8, 128>}, {transform_indices = @transform_14, window_bounds = array<i64: 8, 128>}, {transform_indices = @transform_15, window_bounds = array<i64: 8, 1>}]} {
    %c0 = arith.constant 0 : index
    %c0_0 = arith.constant 0 : index
    %0 = vector.load %arg1[%c0, %c0_0] : memref<8x128xf32, #tpu.memory_space<vmem>>, vector<8x128xf32>
    %1 = arith.mulf %0, %0 : vector<8x128xf32>
    %cst = arith.constant dense<0.000000e+00> : vector<8xf32>
    %2 = vector.multi_reduction <add>, %1, %cst [1] : vector<8x128xf32> to vector<8xf32>
    %3 = vector.shape_cast %2 : vector<8xf32> to vector<8x1xf32>
    %cst_1 = arith.constant 1.000000e-24 : f32
    %4 = vector.broadcast %cst_1 : f32 to vector<8x1xf32>
    %5 = arith.maximumf %3, %4 : vector<8x1xf32>
    %6 = math.rsqrt %5 : vector<8x1xf32>
    %7 = vector.broadcast %6 : vector<8x1xf32> to vector<8x128xf32>
    %8 = arith.mulf %0, %7 : vector<8x128xf32>
    %9 = arith.truncf %8 : vector<8x128xf32> to vector<8x128xbf16>
    %c0_2 = arith.constant 0 : index
    %c0_3 = arith.constant 0 : index
    %10 = vector.load %arg3[%c0_2, %c0_3] : memref<8x128xbf16, #tpu.memory_space<vmem>>, vector<8x128xbf16>
    %11 = arith.mulf %9, %10 : vector<8x128xbf16>
    %c0_4 = arith.constant 0 : index
    %c0_5 = arith.constant 0 : index
    %12 = vector.load %arg4[%c0_4, %c0_5] : memref<128x128xbf16, #tpu.memory_space<vmem>>, vector<128x128xbf16>
    %cst_6 = arith.constant dense<0.000000e+00> : vector<8x128xf32>
    %13 = tpu.matmul %11, %12, %cst_6 {dimension_numbers = #tpu.dot_dimension_numbers<[1], [0], [0], [1], [0, 0, 1, 1], [], []>} : vector<8x128xbf16>, vector<128x128xbf16>, vector<8x128xf32> -> vector<8x128xf32>
    %c0_7 = arith.constant 0 : index
    %c0_8 = arith.constant 0 : index
    %14 = vector.load %arg5[%c0_7, %c0_8] : memref<1x128xf32, #tpu.memory_space<vmem>>, vector<1x128xf32>
    %15 = vector.broadcast %14 : vector<1x128xf32> to vector<8x128xf32>
    %16 = arith.addf %13, %15 : vector<8x128xf32>
    %17 = math.tanh %16 : vector<8x128xf32>
    %18 = arith.truncf %17 : vector<8x128xf32> to vector<8x128xbf16>
    %c0_9 = arith.constant 0 : index
    %c0_10 = arith.constant 0 : index
    %19 = vector.load %arg6[%c0_9, %c0_10] : memref<128x256xbf16, #tpu.memory_space<vmem>>, vector<128x256xbf16>
    %cst_11 = arith.constant dense<0.000000e+00> : vector<8x256xf32>
    %20 = tpu.matmul %18, %19, %cst_11 {dimension_numbers = #tpu.dot_dimension_numbers<[1], [0], [0], [1], [0, 0, 1, 1], [], []>} : vector<8x128xbf16>, vector<128x256xbf16>, vector<8x256xf32> -> vector<8x256xf32>
    %c0_12 = arith.constant 0 : index
    %c0_13 = arith.constant 0 : index
    %21 = vector.load %arg7[%c0_12, %c0_13] : memref<1x256xf32, #tpu.memory_space<vmem>>, vector<1x256xf32>
    %22 = vector.broadcast %21 : vector<1x256xf32> to vector<8x256xf32>
    %23 = arith.addf %20, %22 : vector<8x256xf32>
    %24 = vector.extract_strided_slice %23 {offsets = [0, 0], sizes = [8, 128], strides = [1, 1]} : vector<8x256xf32> to vector<8x128xf32>
    %25 = vector.extract_strided_slice %23 {offsets = [0, 128], sizes = [8, 128], strides = [1, 1]} : vector<8x256xf32> to vector<8x128xf32>
    %cst_14 = arith.constant 5.000000e-01 : f32
    %26 = vector.broadcast %cst_14 : f32 to vector<8x128xf32>
    %27 = arith.mulf %26, %25 : vector<8x128xf32>
    %28 = math.exp %27 : vector<8x128xf32>
    %cst_15 = arith.constant 0.000000e+00 : f32
    %29 = vector.broadcast %cst_15 : f32 to vector<8x128xf32>
    %30 = arith.subf %29, %25 : vector<8x128xf32>
    %31 = arith.mulf %28, %28 : vector<8x128xf32>
    %32 = arith.addf %30, %31 : vector<8x128xf32>
    %33 = arith.mulf %24, %24 : vector<8x128xf32>
    %34 = arith.addf %32, %33 : vector<8x128xf32>
    %cst_16 = arith.constant 1.000000e+00 : f32
    %35 = vector.broadcast %cst_16 : f32 to vector<8x128xf32>
    %36 = arith.subf %34, %35 : vector<8x128xf32>
    %cst_17 = arith.constant 5.000000e-01 : f32
    %37 = vector.broadcast %cst_17 : f32 to vector<8x128xf32>
    %38 = arith.mulf %37, %36 : vector<8x128xf32>
    %cst_18 = arith.constant dense<0.000000e+00> : vector<8xf32>
    %39 = vector.multi_reduction <add>, %38, %cst_18 [1] : vector<8x128xf32> to vector<8xf32>
    %40 = vector.shape_cast %39 : vector<8xf32> to vector<8x1xf32>
    %c0_19 = arith.constant 0 : index
    %c0_20 = arith.constant 0 : index
    %41 = vector.load %arg16[%c0_19, %c0_20] : memref<8x1xf32, #tpu.memory_space<vmem>>, vector<8x1xf32>
    tpu.vector_store %arg16[%c0_19, %c0_20], %40 {strides = array<i32>} : memref<8x1xf32, #tpu.memory_space<vmem>>, vector<8x1xf32>,
    %c0_21 = arith.constant 0 : index
    %c0_22 = arith.constant 0 : index
    %42 = vector.load %arg2[%c0_21, %c0_22] : memref<8x128xbf16, #tpu.memory_space<vmem>>, vector<8x128xbf16>
    %43 = arith.extf %42 : vector<8x128xbf16> to vector<8x128xf32>
    %44 = arith.mulf %43, %28 : vector<8x128xf32>
    %45 = arith.addf %24, %44 : vector<8x128xf32>
    %46 = arith.truncf %45 : vector<8x128xf32> to vector<8x128xbf16>
    %c0_23 = arith.constant 0 : index
    %c0_24 = arith.constant 0 : index
    %47 = vector.load %arg8[%c0_23, %c0_24] : memref<128x256xbf16, #tpu.memory_space<vmem>>, vector<128x256xbf16>
    %cst_25 = arith.constant dense<0.000000e+00> : vector<8x256xf32>
    %48 = tpu.matmul %46, %47, %cst_25 {dimension_numbers = #tpu.dot_dimension_numbers<[1], [0], [0], [1], [0, 0, 1, 1], [], []>} : vector<8x128xbf16>, vector<128x256xbf16>, vector<8x256xf32> -> vector<8x256xf32>
    %c0_26 = arith.constant 0 : index
    %c0_27 = arith.constant 0 : index
    %49 = vector.load %arg9[%c0_26, %c0_27] : memref<1x256xf32, #tpu.memory_space<vmem>>, vector<1x256xf32>
    %50 = vector.broadcast %49 : vector<1x256xf32> to vector<8x256xf32>
    %51 = arith.addf %48, %50 : vector<8x256xf32>
    %52 = math.tanh %51 : vector<8x256xf32>
    %53 = vector.extract_strided_slice %52 {offsets = [0, 0], sizes = [8, 128], strides = [1, 1]} : vector<8x256xf32> to vector<8x128xf32>
    %54 = arith.truncf %53 : vector<8x128xf32> to vector<8x128xbf16>
    %55 = vector.extract_strided_slice %52 {offsets = [0, 128], sizes = [8, 128], strides = [1, 1]} : vector<8x256xf32> to vector<8x128xf32>
    %56 = arith.truncf %55 : vector<8x128xf32> to vector<8x128xbf16>
    %c0_28 = arith.constant 0 : index
    %c0_29 = arith.constant 0 : index
    %57 = vector.load %arg10[%c0_28, %c0_29] : memref<128x128xbf16, #tpu.memory_space<vmem>>, vector<128x128xbf16>
    %cst_30 = arith.constant dense<0.000000e+00> : vector<8x128xf32>
    %58 = tpu.matmul %54, %57, %cst_30 {dimension_numbers = #tpu.dot_dimension_numbers<[1], [0], [0], [1], [0, 0, 1, 1], [], []>} : vector<8x128xbf16>, vector<128x128xbf16>, vector<8x128xf32> -> vector<8x128xf32>
    %c0_31 = arith.constant 0 : index
    %c0_32 = arith.constant 0 : index
    %59 = vector.load %arg11[%c0_31, %c0_32] : memref<1x128xf32, #tpu.memory_space<vmem>>, vector<1x128xf32>
    %60 = vector.broadcast %59 : vector<1x128xf32> to vector<8x128xf32>
    %61 = arith.addf %58, %60 : vector<8x128xf32>
    %c0_33 = arith.constant 0 : index
    %c0_34 = arith.constant 0 : index
    %62 = vector.load %arg14[%c0_33, %c0_34] : memref<8x128xf32, #tpu.memory_space<vmem>>, vector<8x128xf32>
    tpu.vector_store %arg14[%c0_33, %c0_34], %61 {strides = array<i32>} : memref<8x128xf32, #tpu.memory_space<vmem>>, vector<8x128xf32>,
    %c0_35 = arith.constant 0 : index
    %c0_36 = arith.constant 0 : index
    %63 = vector.load %arg12[%c0_35, %c0_36] : memref<128x128xbf16, #tpu.memory_space<vmem>>, vector<128x128xbf16>
    %cst_37 = arith.constant dense<0.000000e+00> : vector<8x128xf32>
    %64 = tpu.matmul %56, %63, %cst_37 {dimension_numbers = #tpu.dot_dimension_numbers<[1], [0], [0], [1], [0, 0, 1, 1], [], []>} : vector<8x128xbf16>, vector<128x128xbf16>, vector<8x128xf32> -> vector<8x128xf32>
    %c0_38 = arith.constant 0 : index
    %c0_39 = arith.constant 0 : index
    %65 = vector.load %arg13[%c0_38, %c0_39] : memref<1x128xf32, #tpu.memory_space<vmem>>, vector<1x128xf32>
    %66 = vector.broadcast %65 : vector<1x128xf32> to vector<8x128xf32>
    %67 = arith.addf %64, %66 : vector<8x128xf32>
    %c0_40 = arith.constant 0 : index
    %c0_41 = arith.constant 0 : index
    %68 = vector.load %arg15[%c0_40, %c0_41] : memref<8x128xf32, #tpu.memory_space<vmem>>, vector<8x128xf32>
    tpu.vector_store %arg15[%c0_40, %c0_41], %67 {strides = array<i32>} : memref<8x128xf32, #tpu.memory_space<vmem>>, vector<8x128xf32>,
    return
  }
  func.func @transform_0(%arg0: i32) -> (i32, i32) {
    %c0_i32 = arith.constant 0 : i32
    %c0_i32_0 = arith.constant 0 : i32
    return %arg0, %c0_i32 : i32, i32
  }
  func.func @transform_1(%arg0: i32) -> (i32, i32) {
    %c0_i32 = arith.constant 0 : i32
    %c0_i32_0 = arith.constant 0 : i32
    return %arg0, %c0_i32 : i32, i32
  }
  func.func @transform_2(%arg0: i32) -> (i32, i32) {
    %c0_i32 = arith.constant 0 : i32
    %c0_i32_0 = arith.constant 0 : i32
    return %arg0, %c0_i32 : i32, i32
  }
  func.func @transform_3(%arg0: i32) -> (i32, i32) {
    %c0_i32 = arith.constant 0 : i32
    %c0_i32_0 = arith.constant 0 : i32
    %c0_i32_1 = arith.constant 0 : i32
    return %c0_i32, %c0_i32_0 : i32, i32
  }
  func.func @transform_4(%arg0: i32) -> (i32, i32) {
    %c0_i32 = arith.constant 0 : i32
    %c0_i32_0 = arith.constant 0 : i32
    %c0_i32_1 = arith.constant 0 : i32
    return %c0_i32, %c0_i32_0 : i32, i32
  }
  func.func @transform_5(%arg0: i32) -> (i32, i32) {
    %c0_i32 = arith.constant 0 : i32
    %c0_i32_0 = arith.constant 0 : i32
    %c0_i32_1 = arith.constant 0 : i32
    return %c0_i32, %c0_i32_0 : i32, i32
  }
  func.func @transform_6(%arg0: i32) -> (i32, i32) {
    %c0_i32 = arith.constant 0 : i32
    %c0_i32_0 = arith.constant 0 : i32
    %c0_i32_1 = arith.constant 0 : i32
    return %c0_i32, %c0_i32_0 : i32, i32
  }
  func.func @transform_7(%arg0: i32) -> (i32, i32) {
    %c0_i32 = arith.constant 0 : i32
    %c0_i32_0 = arith.constant 0 : i32
    %c0_i32_1 = arith.constant 0 : i32
    return %c0_i32, %c0_i32_0 : i32, i32
  }
  func.func @transform_8(%arg0: i32) -> (i32, i32) {
    %c0_i32 = arith.constant 0 : i32
    %c0_i32_0 = arith.constant 0 : i32
    %c0_i32_1 = arith.constant 0 : i32
    return %c0_i32, %c0_i32_0 : i32, i32
  }
  func.func @transform_9(%arg0: i32) -> (i32, i32) {
    %c0_i32 = arith.constant 0 : i32
    %c0_i32_0 = arith.constant 0 : i32
    %c0_i32_1 = arith.constant 0 : i32
    return %c0_i32, %c0_i32_0 : i32, i32
  }
  func.func @transform_10(%arg0: i32) -> (i32, i32) {
    %c0_i32 = arith.constant 0 : i32
    %c0_i32_0 = arith.constant 0 : i32
    %c0_i32_1 = arith.constant 0 : i32
    return %c0_i32, %c0_i32_0 : i32, i32
  }
  func.func @transform_11(%arg0: i32) -> (i32, i32) {
    %c0_i32 = arith.constant 0 : i32
    %c0_i32_0 = arith.constant 0 : i32
    %c0_i32_1 = arith.constant 0 : i32
    return %c0_i32, %c0_i32_0 : i32, i32
  }
  func.func @transform_12(%arg0: i32) -> (i32, i32) {
    %c0_i32 = arith.constant 0 : i32
    %c0_i32_0 = arith.constant 0 : i32
    %c0_i32_1 = arith.constant 0 : i32
    return %c0_i32, %c0_i32_0 : i32, i32
  }
  func.func @transform_13(%arg0: i32) -> (i32, i32) {
    %c0_i32 = arith.constant 0 : i32
    %c0_i32_0 = arith.constant 0 : i32
    return %arg0, %c0_i32 : i32, i32
  }
  func.func @transform_14(%arg0: i32) -> (i32, i32) {
    %c0_i32 = arith.constant 0 : i32
    %c0_i32_0 = arith.constant 0 : i32
    return %arg0, %c0_i32 : i32, i32
  }
  func.func @transform_15(%arg0: i32) -> (i32, i32) {
    %c0_i32 = arith.constant 0 : i32
    %c0_i32_0 = arith.constant 0 : i32
    return %arg0, %c0_i32 : i32, i32
  }
}

</mosaic_0001>

<llo_original>
// kernel: forward.1
$region0: #{forward.1}
  #allocation0 [shape = 'u32[]', space=smem, size = 0x4, offset = 0x4, fixed_abs, tag = 'smem constant byte address 0x4 - core index']
  #allocation1 [shape = 'u32[144,128]{1,0:T(1,128)}', space=vmem, size = 0x12000, scoped, tag = 'internal scratch']
  %s0 = inlined_call_operand.vmem [shape: f32[8,128], index: 0, kind: input, shape index: {}]
  %s1 = inlined_call_operand.vmem [shape: bf16[8,128], index: 1, kind: input, shape index: {}]
  %s2 = inlined_call_operand.vmem [shape: bf16[8,128], index: 2, kind: input, shape index: {}]
  %s3 = inlined_call_operand.hbm [shape: bf16[128,128], index: 3, kind: input, shape index: {}]
  %s4 = inlined_call_operand.vmem [shape: f32[1,128], index: 4, kind: input, shape index: {}]
  %s5 = inlined_call_operand.vmem [shape: bf16[128,256], index: 5, kind: input, shape index: {}]
  %s6 = inlined_call_operand.vmem [shape: f32[1,256], index: 6, kind: input, shape index: {}]
  %s7 = inlined_call_operand.hbm [shape: bf16[128,256], index: 7, kind: input, shape index: {}]
  %s8 = inlined_call_operand.vmem [shape: f32[1,256], index: 8, kind: input, shape index: {}]
  %s9 = inlined_call_operand.hbm [shape: bf16[128,128], index: 9, kind: input, shape index: {}]
  %s10 = inlined_call_operand.vmem [shape: f32[1,128], index: 10, kind: input, shape index: {}]
  %s11 = inlined_call_operand.hbm [shape: bf16[128,128], index: 11, kind: input, shape index: {}]
  %s12 = inlined_call_operand.vmem [shape: f32[1,128], index: 12, kind: input, shape index: {}]
  %s13 = inlined_call_operand.hbm [shape: f32[8,128], index: 13, kind: output, shape index: {0}]
  %s14 = inlined_call_operand.hbm [shape: f32[8,128], index: 14, kind: output, shape index: {1}]
  %s15 = inlined_call_operand.vmem [shape: f32[8,1], index: 15, kind: output, shape index: {2}]
  %16 = xla_tuple %s13, %s14, %s15
  %s17 = sld [smem:[#allocation0]]
  $region94: #{forward.1} parent=0
    _
  %s19 = ssub.s32 1, %s17
  %s20 = scalar_select 0, %s19, %s17
  $region1: #{forward.1} parent=0
    #allocation2 [shape = 'u8[32768]{0}', space=vmem, size = 0x8000, scoped, tag = 'input window, operand 3, single buffered']
    #allocation3 [shape = 's32[1]{0}', space=sflag, size = 0x4, scoped, tag = 'scoped memory for forward.1']
    #allocation4 [shape = 's32[1]{0}', space=sflag, size = 0x4, scoped, tag = 'scoped memory for forward.1']
    #allocation5 [shape = 'u8[65536]{0}', space=vmem, size = 0x10000, scoped, tag = 'input window, operand 7, single buffered']
    #allocation6 [shape = 's32[1]{0}', space=sflag, size = 0x4, scoped, tag = 'scoped memory for forward.1']
    #allocation7 [shape = 'u8[32768]{0}', space=vmem, size = 0x8000, scoped, tag = 'input window, operand 9, single buffered']
    #allocation8 [shape = 'u8[32768]{0}', space=vmem, size = 0x8000, scoped, tag = 'input window, operand 11, single buffered']
    #allocation9 [shape = 's32[1]{0}', space=sflag, size = 0x4, scoped, tag = 'scoped memory for forward.1']
    #allocation10 [shape = 'u8[4096]{0}', space=vmem, size = 0x1000, scoped, tag = 'output window, operand 0, single buffered']
    #allocation11 [shape = 'u8[4096]{0}', space=vmem, size = 0x1000, scoped, tag = 'output window, operand 1, single buffered']
    #allocation12 [shape = 's32[1]{0}', space=sflag, size = 0x4, scoped, tag = 'scoped memory for forward.1']
    %21 = vsyncpa [#allocation3], 0
    %22 = vsyncpa [#allocation6], 0
    %23 = vsyncpa [#allocation9], 0
    %24 = vsyncpa [#allocation4], 0
    %25 = vsyncpa [#allocation12], 0
    // Predicated region
    $region2: #{forward.1} parent=1 // pred_check
      _
    $region3: #{forward.1} parent=1 // pred_check_branch
      %27 = sbr.rel (0) target = $region5
    $region4: #{forward.1} parent=1 // pred_region
      _
    $region5: #{forward.1} parent=1 // pred_fallthru
      _
    // Predicated region
    $region6: #{forward.1} parent=1 // pred_check
      _
    $region7: #{forward.1} parent=1 // pred_check_branch
      %29 = sbr.rel (0) target = $region9
    $region8: #{forward.1} parent=1 // pred_region
      _
    $region9: #{forward.1} parent=1 // pred_fallthru
      _
    // Predicated region
    $region10: #{forward.1} parent=1 // pred_check
      _
    $region11: #{forward.1} parent=1 // pred_check_branch
      %31 = sbr.rel (0) target = $region13
    $region12: #{forward.1} parent=1 // pred_region
      _
    $region13: #{forward.1} parent=1 // pred_fallthru
      _
    // Predicated region
    $region14: #{forward.1} parent=1 // pred_check
      _
    $region15: #{forward.1} parent=1 // pred_check_branch
      %33 = sbr.rel (0) target = $region17
    $region16: #{forward.1} parent=1 // pred_region
      %s35 = ssub.s32 1024, 1024
      %36 = vsyncadd [#allocation3], %s35
      %s37 = sshll.u32 [#allocation2], 4
      %s38 = int_to_ptr.vmem [resolvable:$true] %s37
      %43 = dma.hbm_to_vmem [thread:$0]  %s3, 1024, %s38, [#allocation3], 64, 64, 4
    $region17: #{forward.1} parent=1 // pred_fallthru
      _
    // Predicated region
    $region18: #{forward.1} parent=1 // pred_check
      _
    $region19: #{forward.1} parent=1 // pred_check_branch
      %45 = sbr.rel (0) target = $region21
    $region20: #{forward.1} parent=1 // pred_region
      _
    $region21: #{forward.1} parent=1 // pred_fallthru
      _
    // Predicated region
    $region22: #{forward.1} parent=1 // pred_check
      _
    $region23: #{forward.1} parent=1 // pred_check_branch
      %47 = sbr.rel (0) target = $region25
    $region24: #{forward.1} parent=1 // pred_region
      _
    $region25: #{forward.1} parent=1 // pred_fallthru
      _
    // Predicated region
    $region26: #{forward.1} parent=1 // pred_check
      _
    $region27: #{forward.1} parent=1 // pred_check_branch
      %49 = sbr.rel (0) target = $region29
    $region28: #{forward.1} parent=1 // pred_region
      _
    $region29: #{forward.1} parent=1 // pred_fallthru
      _
    // Predicated region
    $region30: #{forward.1} parent=1 // pred_check
      _
    $region31: #{forward.1} parent=1 // pred_check_branch
      %51 = sbr.rel (0) target = $region33
    $region32: #{forward.1} parent=1 // pred_region
      %s53 = ssub.s32 2048, 2048
      %54 = vsyncadd [#allocation6], %s53
      %s55 = sshll.u32 [#allocation5], 4
      %s56 = int_to_ptr.vmem [resolvable:$true] %s55
      %61 = dma.hbm_to_vmem [thread:$0]  %s7, 2048, %s56, [#allocation6], 128, 128, 8
    $region33: #{forward.1} parent=1 // pred_fallthru
      _
    // Predicated region
    $region34: #{forward.1} parent=1 // pred_check
      _
    $region35: #{forward.1} parent=1 // pred_check_branch
      %63 = sbr.rel (0) target = $region37
    $region36: #{forward.1} parent=1 // pred_region
      _
    $region37: #{forward.1} parent=1 // pred_fallthru
      _
    // Predicated region
    $region38: #{forward.1} parent=1 // pred_check
      _
    $region39: #{forward.1} parent=1 // pred_check_branch
      %65 = sbr.rel (0) target = $region41
    $region40: #{forward.1} parent=1 // pred_region
      %s67 = ssub.s32 1024, 1024
      %68 = vsyncadd [#allocation6], %s67
      %s69 = sshll.u32 [#allocation7], 4
      %s70 = int_to_ptr.vmem [resolvable:$true] %s69
      %75 = dma.hbm_to_vmem [thread:$0]  %s9, 1024, %s70, [#allocation6], 64, 64, 4
    $region41: #{forward.1} parent=1 // pred_fallthru
      _
    // Predicated region
    $region42: #{forward.1} parent=1 // pred_check
      _
    $region43: #{forward.1} parent=1 // pred_check_branch
      %77 = sbr.rel (0) target = $region45
    $region44: #{forward.1} parent=1 // pred_region
      _
    $region45: #{forward.1} parent=1 // pred_fallthru
      _
    // Predicated region
    $region46: #{forward.1} parent=1 // pred_check
      _
    $region47: #{forward.1} parent=1 // pred_check_branch
      %79 = sbr.rel (0) target = $region49
    $region48: #{forward.1} parent=1 // pred_region
      %s81 = ssub.s32 1024, 1024
      %82 = vsyncadd [#allocation9], %s81
      %s83 = sshll.u32 [#allocation8], 4
      %s84 = int_to_ptr.vmem [resolvable:$true] %s83
      %89 = dma.hbm_to_vmem [thread:$0]  %s11, 1024, %s84, [#allocation9], 64, 64, 4
    $region49: #{forward.1} parent=1 // pred_fallthru
      _
    // Predicated region
    $region50: #{forward.1} parent=1 // pred_check
      _
    $region51: #{forward.1} parent=1 // pred_check_branch
      %91 = sbr.rel (0) target = $region53
    $region52: #{forward.1} parent=1 // pred_region
      _
    $region53: #{forward.1} parent=1 // pred_fallthru
      _
    // Predicated region
    $region54: #{forward.1} parent=1 // pred_check
      _
    $region55: #{forward.1} parent=1 // pred_check_branch
      %93 = sbr.rel (0) target = $region57
    $region56: #{forward.1} parent=1 // pred_region
      %94 = dma.done [#allocation3], 1024
    $region57: #{forward.1} parent=1 // pred_fallthru
      _
    // Predicated region
    $region58: #{forward.1} parent=1 // pred_check
      _
    $region59: #{forward.1} parent=1 // pred_check_branch
      %96 = sbr.rel (0) target = $region61
    $region60: #{forward.1} parent=1 // pred_region
      %97 = dma.done [#allocation6], 2048
    $region61: #{forward.1} parent=1 // pred_fallthru
      _
    // Predicated region
    $region62: #{forward.1} parent=1 // pred_check
      _
    $region63: #{forward.1} parent=1 // pred_check_branch
      %99 = sbr.rel (0) target = $region65
    $region64: #{forward.1} parent=1 // pred_region
      %100 = dma.done [#allocation6], 1024
    $region65: #{forward.1} parent=1 // pred_fallthru
      _
    // Predicated region
    $region66: #{forward.1} parent=1 // pred_check
      _
    $region67: #{forward.1} parent=1 // pred_check_branch
      %102 = sbr.rel (0) target = $region69
    $region68: #{forward.1} parent=1 // pred_region
      %103 = dma.done [#allocation9], 1024
    $region69: #{forward.1} parent=1 // pred_fallthru
      _
    %v105 = vld [vmem:[%s0] sm:$0xff]
    %v106 = vmul.f32 %v105, %v105
    %107 = vadd.xlane.f32.xlu0 %v106
    %v108 = vpop.xlane.xlu0 %107
    %v109 = vmax.f32 %v108, 1e-24
    %v110 = vrsqrt.pop %v109
    %v111 = vmul.f32 %v105, %v110
    %v112 = vpack.c.bf16 %v111, %v111
    %v113 = vld [vmem:[%s2] sm:$0xf]
    %v114 = vmul.bf16 %v112, %v113
    %v115 = vld [vmem:[#allocation2] sm:$0xf]
    %v116 = vld [vmem:[#allocation2 + $0x4] sm:$0xf]
    %v117 = vld [vmem:[#allocation2 + $0x8] sm:$0xf]
    %v118 = vld [vmem:[#allocation2 + $0xc] sm:$0xf]
    %v119 = vld [vmem:[#allocation2 + $0x10] sm:$0xf]
    %v120 = vld [vmem:[#allocation2 + $0x14] sm:$0xf]
    %v121 = vld [vmem:[#allocation2 + $0x18] sm:$0xf]
    %v122 = vld [vmem:[#allocation2 + $0x1c] sm:$0xf]
    %v123 = vld [vmem:[#allocation2 + $0x20] sm:$0xf]
    %v124 = vld [vmem:[#allocation2 + $0x24] sm:$0xf]
    %v125 = vld [vmem:[#allocation2 + $0x28] sm:$0xf]
    %v126 = vld [vmem:[#allocation2 + $0x2c] sm:$0xf]
    %v127 = vld [vmem:[#allocation2 + $0x30] sm:$0xf]
    %v128 = vld [vmem:[#allocation2 + $0x34] sm:$0xf]
    %v129 = vld [vmem:[#allocation2 + $0x38] sm:$0xf]
    %v130 = vld [vmem:[#allocation2 + $0x3c] sm:$0xf]
    %v131 = vld [vmem:[%s4] sm:$0x1]
    %v133 = vlaneseq
    %v134 = vshrl.u32 %v133, 7
    %v135 = vsub.s32 0, %v134
    %v136 = vrot.slane %v131, %v135
    %v154 = vunpack.c.l.b16 %v115
    %v155 = vunpack.c.l.b16 %v116
    %v156 = vunpack.c.l.b16 %v117
    %v157 = vunpack.c.l.b16 %v118
    %v158 = vunpack.c.l.b16 %v119
    %v159 = vunpack.c.l.b16 %v120
    %v160 = vunpack.c.l.b16 %v121
    %v161 = vunpack.c.l.b16 %v122
    %v162 = vunpack.c.l.b16 %v123
    %v163 = vunpack.c.l.b16 %v124
    %v164 = vunpack.c.l.b16 %v125
    %v165 = vunpack.c.l.b16 %v126
    %v166 = vunpack.c.l.b16 %v127
    %v167 = vunpack.c.l.b16 %v128
    %v168 = vunpack.c.l.b16 %v129
    %v169 = vunpack.c.l.b16 %v130
    %v170 = vpack.c.b16 %v155, %v154
    %v171 = vpack.c.b16 %v157, %v156
    %v172 = vpack.c.b16 %v159, %v158
    %v173 = vpack.c.b16 %v161, %v160
    %v174 = vpack.c.b16 %v163, %v162
    %v175 = vpack.c.b16 %v165, %v164
    %v176 = vpack.c.b16 %v167, %v166
    %v177 = vpack.c.b16 %v169, %v168
    %186 = vmatprep.subr.bf16.mxu0 0
    %187 = vmatpush1.bf16.msra.mxu0 %v170
    %188 = vmatprep.subr.bf16.mxu0 0
    %189 = vmatpush1.bf16.msra.mxu0 %v171
    %190 = vmatprep.subr.bf16.mxu0 0
    %191 = vmatpush1.bf16.msra.mxu0 %v172
    %192 = vmatprep.subr.bf16.mxu0 0
    %193 = vmatpush1.bf16.msra.mxu0 %v173
    %194 = vmatprep.subr.bf16.mxu0 0
    %195 = vmatpush1.bf16.msra.mxu0 %v174
    %196 = vmatprep.subr.bf16.mxu0 0
    %197 = vmatpush1.bf16.msra.mxu0 %v175
    %198 = vmatprep.subr.bf16.mxu0 0
    %199 = vmatpush1.bf16.msra.mxu0 %v176
    %200 = vmatprep.subr.bf16.mxu0 0
    %201 = vmatpush1.bf16.msra.mxu0 %v177
    %202 = vmatprep.subr.bf16.mxu0 0
    %203 = vmatpush1.bf16.msra.mxu0 0
    %204 = vmatprep.subr.bf16.mxu0 0
    %205 = vmatpush1.bf16.msra.mxu0 0
    %206 = vmatprep.subr.bf16.mxu0 0
    %207 = vmatpush1.bf16.msra.mxu0 0
    %208 = vmatprep.subr.bf16.mxu0 0
    %209 = vmatpush1.bf16.msra.mxu0 0
    %210 = vmatprep.subr.bf16.mxu0 0
    %211 = vmatpush1.bf16.msra.mxu0 0
    %212 = vmatprep.subr.bf16.mxu0 0
    %213 = vmatpush1.bf16.msra.mxu0 0
    %214 = vmatprep.subr.bf16.mxu0 0
    %215 = vmatpush1.bf16.msra.mxu0 0
    %216 = vmatprep.subr.bf16.mxu0 0
    %217 = vmatpush1.bf16.msra.mxu0 0
    %218 = vmatprep.mubr.bf16.mxu0 0
    %219 = vmatmul.mubr.bf16.gmra.mrb[0].mxu0 %v114
    %v220 = vpop.f32.mrb[0].mxu0
    %v221 = vadd.f32 %v136, %v220
    %v222 = vpop.f32.mrb[0].mxu0
    %v223 = vpop.f32.mrb[0].mxu0
    %v224 = vpop.f32.mrb[0].mxu0
    %225 = vdwg.mxu0
    %v226 = vtanh.pop %v221
    %v227 = vpack.c.bf16 %v226, %v226
    %v228 = vld [vmem:[%s5] sm:$0xff]
    %v229 = vld [vmem:[%s5 + $0x8] sm:$0xff]
    %v230 = vld [vmem:[%s5 + $0x10] sm:$0xff]
    %v231 = vld [vmem:[%s5 + $0x18] sm:$0xff]
    %v232 = vld [vmem:[%s5 + $0x20] sm:$0xff]
    %v233 = vld [vmem:[%s5 + $0x28] sm:$0xff]
    %v234 = vld [vmem:[%s5 + $0x30] sm:$0xff]
    %v235 = vld [vmem:[%s5 + $0x38] sm:$0xff]
    %v236 = vld [vmem:[%s5 + $0x40] sm:$0xff]
    %v237 = vld [vmem:[%s5 + $0x48] sm:$0xff]
    %v238 = vld [vmem:[%s5 + $0x50] sm:$0xff]
    %v239 = vld [vmem:[%s5 + $0x58] sm:$0xff]
    %v240 = vld [vmem:[%s5 + $0x60] sm:$0xff]
    %v241 = vld [vmem:[%s5 + $0x68] sm:$0xff]
    %v242 = vld [vmem:[%s5 + $0x70] sm:$0xff]
    %v243 = vld [vmem:[%s5 + $0x78] sm:$0xff]
    %v244 = vld [vmem:[%s6] sm:$0x3]
    %v246 = vlaneseq
    %v247 = vshrl.u32 %v246, 7
    %v248 = vsub.s32 0, %v247
    %v249 = vrot.slane %v244, %v248
    %v250 = vlaneseq
    %v251 = vshrl.u32 %v250, 7
    %v252 = vsub.s32 1, %v251
    %v253 = vrot.slane %v244, %v252
    %v272 = vunpack.c.l.b16 %v228
    %v273 = vunpack.c.h.b16 %v228
    %v274 = vunpack.c.l.b16 %v229
    %v275 = vunpack.c.h.b16 %v229
    %v276 = vunpack.c.l.b16 %v230
    %v277 = vunpack.c.h.b16 %v230
    %v278 = vunpack.c.l.b16 %v231
    %v279 = vunpack.c.h.b16 %v231
    %v280 = vunpack.c.l.b16 %v232
    %v281 = vunpack.c.h.b16 %v232
    %v282 = vunpack.c.l.b16 %v233
    %v283 = vunpack.c.h.b16 %v233
    %v284 = vunpack.c.l.b16 %v234
    %v285 = vunpack.c.h.b16 %v234
    %v286 = vunpack.c.l.b16 %v235
    %v287 = vunpack.c.h.b16 %v235
    %v288 = vunpack.c.l.b16 %v236
    %v289 = vunpack.c.h.b16 %v236
    %v290 = vunpack.c.l.b16 %v237
    %v291 = vunpack.c.h.b16 %v237
    %v292 = vunpack.c.l.b16 %v238
    %v293 = vunpack.c.h.b16 %v238
    %v294 = vunpack.c.l.b16 %v239
    %v295 = vunpack.c.h.b16 %v239
    %v296 = vunpack.c.l.b16 %v240
    %v297 = vunpack.c.h.b16 %v240
    %v298 = vunpack.c.l.b16 %v241
    %v299 = vunpack.c.h.b16 %v241
    %v300 = vunpack.c.l.b16 %v242
    %v301 = vunpack.c.h.b16 %v242
    %v302 = vunpack.c.l.b16 %v243
    %v303 = vunpack.c.h.b16 %v243
    %v304 = vpack.c.b16 %v274, %v272
    %v305 = vpack.c.b16 %v275, %v273
    %v306 = vpack.c.b16 %v278, %v276
    %v307 = vpack.c.b16 %v279, %v277
    %v308 = vpack.c.b16 %v282, %v280
    %v309 = vpack.c.b16 %v283, %v281
    %v310 = vpack.c.b16 %v286, %v284
    %v311 = vpack.c.b16 %v287, %v285
    %v312 = vpack.c.b16 %v290, %v288
    %v313 = vpack.c.b16 %v291, %v289
    %v314 = vpack.c.b16 %v294, %v292
    %v315 = vpack.c.b16 %v295, %v293
    %v316 = vpack.c.b16 %v298, %v296
    %v317 = vpack.c.b16 %v299, %v297
    %v318 = vpack.c.b16 %v302, %v300
    %v319 = vpack.c.b16 %v303, %v301
    %336 = vmatprep.subr.bf16.mxu0 %v305
    %337 = vmatpush1.bf16.msra.mxu0 %v304
    %338 = vmatprep.subr.bf16.mxu0 %v307
    %339 = vmatpush1.bf16.msra.mxu0 %v306
    %340 = vmatprep.subr.bf16.mxu0 %v309
    %341 = vmatpush1.bf16.msra.mxu0 %v308
    %342 = vmatprep.subr.bf16.mxu0 %v311
    %343 = vmatpush1.bf16.msra.mxu0 %v310
    %344 = vmatprep.subr.bf16.mxu0 %v313
    %345 = vmatpush1.bf16.msra.mxu0 %v312
    %346 = vmatprep.subr.bf16.mxu0 %v315
    %347 = vmatpush1.bf16.msra.mxu0 %v314
    %348 = vmatprep.subr.bf16.mxu0 %v317
    %349 = vmatpush1.bf16.msra.mxu0 %v316
    %350 = vmatprep.subr.bf16.mxu0 %v319
    %351 = vmatpush1.bf16.msra.mxu0 %v318
    %352 = vmatprep.subr.bf16.mxu0 0
    %353 = vmatpush1.bf16.msra.mxu0 0
    %354 = vmatprep.subr.bf16.mxu0 0
    %355 = vmatpush1.bf16.msra.mxu0 0
    %356 = vmatprep.subr.bf16.mxu0 0
    %357 = vmatpush1.bf16.msra.mxu0 0
    %358 = vmatprep.subr.bf16.mxu0 0
    %359 = vmatpush1.bf16.msra.mxu0 0
    %360 = vmatprep.subr.bf16.mxu0 0
    %361 = vmatpush1.bf16.msra.mxu0 0
    %362 = vmatprep.subr.bf16.mxu0 0
    %363 = vmatpush1.bf16.msra.mxu0 0
    %364 = vmatprep.subr.bf16.mxu0 0
    %365 = vmatpush1.bf16.msra.mxu0 0
    %366 = vmatprep.subr.bf16.mxu0 0
    %367 = vmatpush1.bf16.msra.mxu0 0
    %368 = vmatprep.mubr.bf16.mxu0 0
    %369 = vmatmul.mubr.bf16.gmra.mrb[0].mxu0 %v227
    %v370 = vpop.f32.mrb[0].mxu0
    %v371 = vadd.f32 %v249, %v370
    %v372 = vpop.f32.mrb[0].mxu0
    %v373 = vadd.f32 %v253, %v372
    %v374 = vpop.f32.mrb[0].mxu0
    %v375 = vpop.f32.mrb[0].mxu0
    %376 = vdwg.mxu0
    %v377 = vmul.f32 %v373, 0.5
    %v378 = vmul.f32 %v377, 1.442695
    %v379 = vpow.pop %v378
    %v380 = vsub.f32 0.0, %v373
    %v381 = vmul.f32 %v379, %v379
    %v382 = vadd.f32 %v380, %v381
    %v383 = vmul.f32 %v371, %v371
    %v384 = vadd.f32 %v382, %v383
    %v385 = vsub.f32 %v384, 1.0
    %v386 = vmul.f32 %v385, 0.5
    %387 = vadd.xlane.f32.xlu0 %v386
    %v388 = vpop.xlane.xlu0 %387
    %vm389 = vcmask 7168
    %390 = vst.msk [vmem:[%s15] sm:$0xff] %vm389, %v388
    %v391 = vld [vmem:[%s1] sm:$0xf]
    %v392 = vunpack.c.l.bf16 %v391
    %v393 = vmul.f32 %v392, %v379
    %v394 = vadd.f32 %v371, %v393
    %v395 = vpack.c.bf16 %v394, %v394
    %v396 = vld [vmem:[#allocation5] sm:$0xff]
    %v397 = vld [vmem:[#allocation5 + $0x8] sm:$0xff]
    %v398 = vld [vmem:[#allocation5 + $0x10] sm:$0xff]
    %v399 = vld [vmem:[#allocation5 + $0x18] sm:$0xff]
    %v400 = vld [vmem:[#allocation5 + $0x20] sm:$0xff]
    %v401 = vld [vmem:[#allocation5 + $0x28] sm:$0xff]
    %v402 = vld [vmem:[#allocation5 + $0x30] sm:$0xff]
    %v403 = vld [vmem:[#allocation5 + $0x38] sm:$0xff]
    %v404 = vld [vmem:[#allocation5 + $0x40] sm:$0xff]
    %v405 = vld [vmem:[#allocation5 + $0x48] sm:$0xff]
    %v406 = vld [vmem:[#allocation5 + $0x50] sm:$0xff]
    %v407 = vld [vmem:[#allocation5 + $0x58] sm:$0xff]
    %v408 = vld [vmem:[#allocation5 + $0x60] sm:$0xff]
    %v409 = vld [vmem:[#allocation5 + $0x68] sm:$0xff]
    %v410 = vld [vmem:[#allocation5 + $0x70] sm:$0xff]
    %v411 = vld [vmem:[#allocation5 + $0x78] sm:$0xff]
    %v412 = vld [vmem:[%s8] sm:$0x3]
    %v414 = vlaneseq
    %v415 = vshrl.u32 %v414, 7
    %v416 = vsub.s32 0, %v415
    %v417 = vrot.slane %v412, %v416
    %v418 = vlaneseq
    %v419 = vshrl.u32 %v418, 7
    %v420 = vsub.s32 1, %v419
    %v421 = vrot.slane %v412, %v420
    %v440 = vunpack.c.l.b16 %v396
    %v441 = vunpack.c.h.b16 %v396
    %v442 = vunpack.c.l.b16 %v397
    %v443 = vunpack.c.h.b16 %v397
    %v444 = vunpack.c.l.b16 %v398
    %v445 = vunpack.c.h.b16 %v398
    %v446 = vunpack.c.l.b16 %v399
    %v447 = vunpack.c.h.b16 %v399
    %v448 = vunpack.c.l.b16 %v400
    %v449 = vunpack.c.h.b16 %v400
    %v450 = vunpack.c.l.b16 %v401
    %v451 = vunpack.c.h.b16 %v401
    %v452 = vunpack.c.l.b16 %v402
    %v453 = vunpack.c.h.b16 %v402
    %v454 = vunpack.c.l.b16 %v403
    %v455 = vunpack.c.h.b16 %v403
    %v456 = vunpack.c.l.b16 %v404
    %v457 = vunpack.c.h.b16 %v404
    %v458 = vunpack.c.l.b16 %v405
    %v459 = vunpack.c.h.b16 %v405
    %v460 = vunpack.c.l.b16 %v406
    %v461 = vunpack.c.h.b16 %v406
    %v462 = vunpack.c.l.b16 %v407
    %v463 = vunpack.c.h.b16 %v407
    %v464 = vunpack.c.l.b16 %v408
    %v465 = vunpack.c.h.b16 %v408
    %v466 = vunpack.c.l.b16 %v409
    %v467 = vunpack.c.h.b16 %v409
    %v468 = vunpack.c.l.b16 %v410
    %v469 = vunpack.c.h.b16 %v410
    %v470 = vunpack.c.l.b16 %v411
    %v471 = vunpack.c.h.b16 %v411
    %v472 = vpack.c.b16 %v442, %v440
    %v473 = vpack.c.b16 %v443, %v441
    %v474 = vpack.c.b16 %v446, %v444
    %v475 = vpack.c.b16 %v447, %v445
    %v476 = vpack.c.b16 %v450, %v448
    %v477 = vpack.c.b16 %v451, %v449
    %v478 = vpack.c.b16 %v454, %v452
    %v479 = vpack.c.b16 %v455, %v453
    %v480 = vpack.c.b16 %v458, %v456
    %v481 = vpack.c.b16 %v459, %v457
    %v482 = vpack.c.b16 %v462, %v460
    %v483 = vpack.c.b16 %v463, %v461
    %v484 = vpack.c.b16 %v466, %v464
    %v485 = vpack.c.b16 %v467, %v465
    %v486 = vpack.c.b16 %v470, %v468
    %v487 = vpack.c.b16 %v471, %v469
    %504 = vmatprep.subr.bf16.mxu0 %v473
    %505 = vmatpush1.bf16.msra.mxu0 %v472
    %506 = vmatprep.subr.bf16.mxu0 %v475
    %507 = vmatpush1.bf16.msra.mxu0 %v474
    %508 = vmatprep.subr.bf16.mxu0 %v477
    %509 = vmatpush1.bf16.msra.mxu0 %v476
    %510 = vmatprep.subr.bf16.mxu0 %v479
    %511 = vmatpush1.bf16.msra.mxu0 %v478
    %512 = vmatprep.subr.bf16.mxu0 %v481
    %513 = vmatpush1.bf16.msra.mxu0 %v480
    %514 = vmatprep.subr.bf16.mxu0 %v483
    %515 = vmatpush1.bf16.msra.mxu0 %v482
    %516 = vmatprep.subr.bf16.mxu0 %v485
    %517 = vmatpush1.bf16.msra.mxu0 %v484
    %518 = vmatprep.subr.bf16.mxu0 %v487
    %519 = vmatpush1.bf16.msra.mxu0 %v486
    %520 = vmatprep.subr.bf16.mxu0 0
    %521 = vmatpush1.bf16.msra.mxu0 0
    %522 = vmatprep.subr.bf16.mxu0 0
    %523 = vmatpush1.bf16.msra.mxu0 0
    %524 = vmatprep.subr.bf16.mxu0 0
    %525 = vmatpush1.bf16.msra.mxu0 0
    %526 = vmatprep.subr.bf16.mxu0 0
    %527 = vmatpush1.bf16.msra.mxu0 0
    %528 = vmatprep.subr.bf16.mxu0 0
    %529 = vmatpush1.bf16.msra.mxu0 0
    %530 = vmatprep.subr.bf16.mxu0 0
    %531 = vmatpush1.bf16.msra.mxu0 0
    %532 = vmatprep.subr.bf16.mxu0 0
    %533 = vmatpush1.bf16.msra.mxu0 0
    %534 = vmatprep.subr.bf16.mxu0 0
    %535 = vmatpush1.bf16.msra.mxu0 0
    %536 = vmatprep.mubr.bf16.mxu0 0
    %537 = vmatmul.mubr.bf16.gmra.mrb[0].mxu0 %v395
    %v538 = vpop.f32.mrb[0].mxu0
    %v539 = vadd.f32 %v417, %v538
    %v540 = vpop.f32.mrb[0].mxu0
    %v541 = vadd.f32 %v421, %v540
    %v542 = vpop.f32.mrb[0].mxu0
    %v543 = vpop.f32.mrb[0].mxu0
    %544 = vdwg.mxu0
    %v545 = vtanh.pop %v539
    %v546 = vtanh.pop %v541
    %v547 = vpack.c.bf16 %v545, %v545
    %v548 = vpack.c.bf16 %v546, %v546
    %v549 = vld [vmem:[#allocation7] sm:$0xf]
    %v550 = vld [vmem:[#allocation7 + $0x4] sm:$0xf]
    %v551 = vld [vmem:[#allocation7 + $0x8] sm:$0xf]
    %v552 = vld [vmem:[#allocation7 + $0xc] sm:$0xf]
    %v553 = vld [vmem:[#allocation7 + $0x10] sm:$0xf]
    %v554 = vld [vmem:[#allocation7 + $0x14] sm:$0xf]
    %v555 = vld [vmem:[#allocation7 + $0x18] sm:$0xf]
    %v556 = vld [vmem:[#allocation7 + $0x1c] sm:$0xf]
    %v557 = vld [vmem:[#allocation7 + $0x20] sm:$0xf]
    %v558 = vld [vmem:[#allocation7 + $0x24] sm:$0xf]
    %v559 = vld [vmem:[#allocation7 + $0x28] sm:$0xf]
    %v560 = vld [vmem:[#allocation7 + $0x2c] sm:$0xf]
    %v561 = vld [vmem:[#allocation7 + $0x30] sm:$0xf]
    %v562 = vld [vmem:[#allocation7 + $0x34] sm:$0xf]
    %v563 = vld [vmem:[#allocation7 + $0x38] sm:$0xf]
    %v564 = vld [vmem:[#allocation7 + $0x3c] sm:$0xf]
    %v565 = vld [vmem:[%s10] sm:$0x1]
    %v567 = vlaneseq
    %v568 = vshrl.u32 %v567, 7
    %v569 = vsub.s32 0, %v568
    %v570 = vrot.slane %v565, %v569
    %v588 = vunpack.c.l.b16 %v549
    %v589 = vunpack.c.l.b16 %v550
    %v590 = vunpack.c.l.b16 %v551
    %v591 = vunpack.c.l.b16 %v552
    %v592 = vunpack.c.l.b16 %v553
    %v593 = vunpack.c.l.b16 %v554
    %v594 = vunpack.c.l.b16 %v555
    %v595 = vunpack.c.l.b16 %v556
    %v596 = vunpack.c.l.b16 %v557
    %v597 = vunpack.c.l.b16 %v558
    %v598 = vunpack.c.l.b16 %v559
    %v599 = vunpack.c.l.b16 %v560
    %v600 = vunpack.c.l.b16 %v561
    %v601 = vunpack.c.l.b16 %v562
    %v602 = vunpack.c.l.b16 %v563
    %v603 = vunpack.c.l.b16 %v564
    %v604 = vpack.c.b16 %v589, %v588
    %v605 = vpack.c.b16 %v591, %v590
    %v606 = vpack.c.b16 %v593, %v592
    %v607 = vpack.c.b16 %v595, %v594
    %v608 = vpack.c.b16 %v597, %v596
    %v609 = vpack.c.b16 %v599, %v598
    %v610 = vpack.c.b16 %v601, %v600
    %v611 = vpack.c.b16 %v603, %v602
    %620 = vmatprep.subr.bf16.mxu0 0
    %621 = vmatpush1.bf16.msra.mxu0 %v604
    %622 = vmatprep.subr.bf16.mxu0 0
    %623 = vmatpush1.bf16.msra.mxu0 %v605
    %624 = vmatprep.subr.bf16.mxu0 0
    %625 = vmatpush1.bf16.msra.mxu0 %v606
    %626 = vmatprep.subr.bf16.mxu0 0
    %627 = vmatpush1.bf16.msra.mxu0 %v607
    %628 = vmatprep.subr.bf16.mxu0 0
    %629 = vmatpush1.bf16.msra.mxu0 %v608
    %630 = vmatprep.subr.bf16.mxu0 0
    %631 = vmatpush1.bf16.msra.mxu0 %v609
    %632 = vmatprep.subr.bf16.mxu0 0
    %633 = vmatpush1.bf16.msra.mxu0 %v610
    %634 = vmatprep.subr.bf16.mxu0 0
    %635 = vmatpush1.bf16.msra.mxu0 %v611
    %636 = vmatprep.subr.bf16.mxu0 0
    %637 = vmatpush1.bf16.msra.mxu0 0
    %638 = vmatprep.subr.bf16.mxu0 0
    %639 = vmatpush1.bf16.msra.mxu0 0
    %640 = vmatprep.subr.bf16.mxu0 0
    %641 = vmatpush1.bf16.msra.mxu0 0
    %642 = vmatprep.subr.bf16.mxu0 0
    %643 = vmatpush1.bf16.msra.mxu0 0
    %644 = vmatprep.subr.bf16.mxu0 0
    %645 = vmatpush1.bf16.msra.mxu0 0
    %646 = vmatprep.subr.bf16.mxu0 0
    %647 = vmatpush1.bf16.msra.mxu0 0
    %648 = vmatprep.subr.bf16.mxu0 0
    %649 = vmatpush1.bf16.msra.mxu0 0
    %650 = vmatprep.subr.bf16.mxu0 0
    %651 = vmatpush1.bf16.msra.mxu0 0
    %652 = vmatprep.mubr.bf16.mxu0 0
    %653 = vmatmul.mubr.bf16.gmra.mrb[0].mxu0 %v547
    %v654 = vpop.f32.mrb[0].mxu0
    %v655 = vadd.f32 %v570, %v654
    %v656 = vpop.f32.mrb[0].mxu0
    %v657 = vpop.f32.mrb[0].mxu0
    %v658 = vpop.f32.mrb[0].mxu0
    %659 = vdwg.mxu0
    %660 = vst [vmem:[#allocation10] sm:$0xff] %v655
    %v661 = vld [vmem:[#allocation8] sm:$0xf]
    %v662 = vld [vmem:[#allocation8 + $0x4] sm:$0xf]
    %v663 = vld [vmem:[#allocation8 + $0x8] sm:$0xf]
    %v664 = vld [vmem:[#allocation8 + $0xc] sm:$0xf]
    %v665 = vld [vmem:[#allocation8 + $0x10] sm:$0xf]
    %v666 = vld [vmem:[#allocation8 + $0x14] sm:$0xf]
    %v667 = vld [vmem:[#allocation8 + $0x18] sm:$0xf]
    %v668 = vld [vmem:[#allocation8 + $0x1c] sm:$0xf]
    %v669 = vld [vmem:[#allocation8 + $0x20] sm:$0xf]
    %v670 = vld [vmem:[#allocation8 + $0x24] sm:$0xf]
    %v671 = vld [vmem:[#allocation8 + $0x28] sm:$0xf]
    %v672 = vld [vmem:[#allocation8 + $0x2c] sm:$0xf]
    %v673 = vld [vmem:[#allocation8 + $0x30] sm:$0xf]
    %v674 = vld [vmem:[#allocation8 + $0x34] sm:$0xf]
    %v675 = vld [vmem:[#allocation8 + $0x38] sm:$0xf]
    %v676 = vld [vmem:[#allocation8 + $0x3c] sm:$0xf]
    %v677 = vld [vmem:[%s12] sm:$0x1]
    %v679 = vlaneseq
    %v680 = vshrl.u32 %v679, 7
    %v681 = vsub.s32 0, %v680
    %v682 = vrot.slane %v677, %v681
    %v700 = vunpack.c.l.b16 %v661
    %v701 = vunpack.c.l.b16 %v662
    %v702 = vunpack.c.l.b16 %v663
    %v703 = vunpack.c.l.b16 %v664
    %v704 = vunpack.c.l.b16 %v665
    %v705 = vunpack.c.l.b16 %v666
    %v706 = vunpack.c.l.b16 %v667
    %v707 = vunpack.c.l.b16 %v668
    %v708 = vunpack.c.l.b16 %v669
    %v709 = vunpack.c.l.b16 %v670
    %v710 = vunpack.c.l.b16 %v671
    %v711 = vunpack.c.l.b16 %v672
    %v712 = vunpack.c.l.b16 %v673
    %v713 = vunpack.c.l.b16 %v674
    %v714 = vunpack.c.l.b16 %v675
    %v715 = vunpack.c.l.b16 %v676
    %v716 = vpack.c.b16 %v701, %v700
    %v717 = vpack.c.b16 %v703, %v702
    %v718 = vpack.c.b16 %v705, %v704
    %v719 = vpack.c.b16 %v707, %v706
    %v720 = vpack.c.b16 %v709, %v708
    %v721 = vpack.c.b16 %v711, %v710
    %v722 = vpack.c.b16 %v713, %v712
    %v723 = vpack.c.b16 %v715, %v714
    %732 = vmatprep.subr.bf16.mxu0 0
    %733 = vmatpush1.bf16.msra.mxu0 %v716
    %734 = vmatprep.subr.bf16.mxu0 0
    %735 = vmatpush1.bf16.msra.mxu0 %v717
    %736 = vmatprep.subr.bf16.mxu0 0
    %737 = vmatpush1.bf16.msra.mxu0 %v718
    %738 = vmatprep.subr.bf16.mxu0 0
    %739 = vmatpush1.bf16.msra.mxu0 %v719
    %740 = vmatprep.subr.bf16.mxu0 0
    %741 = vmatpush1.bf16.msra.mxu0 %v720
    %742 = vmatprep.subr.bf16.mxu0 0
    %743 = vmatpush1.bf16.msra.mxu0 %v721
    %744 = vmatprep.subr.bf16.mxu0 0
    %745 = vmatpush1.bf16.msra.mxu0 %v722
    %746 = vmatprep.subr.bf16.mxu0 0
    %747 = vmatpush1.bf16.msra.mxu0 %v723
    %748 = vmatprep.subr.bf16.mxu0 0
    %749 = vmatpush1.bf16.msra.mxu0 0
    %750 = vmatprep.subr.bf16.mxu0 0
    %751 = vmatpush1.bf16.msra.mxu0 0
    %752 = vmatprep.subr.bf16.mxu0 0
    %753 = vmatpush1.bf16.msra.mxu0 0
    %754 = vmatprep.subr.bf16.mxu0 0
    %755 = vmatpush1.bf16.msra.mxu0 0
    %756 = vmatprep.subr.bf16.mxu0 0
    %757 = vmatpush1.bf16.msra.mxu0 0
    %758 = vmatprep.subr.bf16.mxu0 0
    %759 = vmatpush1.bf16.msra.mxu0 0
    %760 = vmatprep.subr.bf16.mxu0 0
    %761 = vmatpush1.bf16.msra.mxu0 0
    %762 = vmatprep.subr.bf16.mxu0 0
    %763 = vmatpush1.bf16.msra.mxu0 0
    %764 = vmatprep.mubr.bf16.mxu0 0
    %765 = vmatmul.mubr.bf16.gmra.mrb[0].mxu0 %v548
    %v766 = vpop.f32.mrb[0].mxu0
    %v767 = vadd.f32 %v682, %v766
    %v768 = vpop.f32.mrb[0].mxu0
    %v769 = vpop.f32.mrb[0].mxu0
    %v770 = vpop.f32.mrb[0].mxu0
    %771 = vdwg.mxu0
    %772 = vst [vmem:[#allocation11] sm:$0xff] %v767
    // Predicated region
    $region70: #{forward.1} parent=1 // pred_check
      _
    $region71: #{forward.1} parent=1 // pred_check_branch
      %774 = sbr.rel (0) target = $region73
    $region72: #{forward.1} parent=1 // pred_region
      %s776 = ssub.s32 128, 128
      %777 = vsyncadd [#allocation4], %s776
      %s779 = sshll.u32 [#allocation10], 4
      %s780 = int_to_ptr.vmem [resolvable:$true] %s779
      %782 = dma.vmem_to_hbm [thread:$0]  %s780, 128, %s13, [#allocation4]
    $region73: #{forward.1} parent=1 // pred_fallthru
      _
    // Predicated region
    $region74: #{forward.1} parent=1 // pred_check
      _
    $region75: #{forward.1} parent=1 // pred_check_branch
      %784 = sbr.rel (0) target = $region77
    $region76: #{forward.1} parent=1 // pred_region
      %s786 = ssub.s32 128, 128
      %787 = vsyncadd [#allocation12], %s786
      %s789 = sshll.u32 [#allocation11], 4
      %s790 = int_to_ptr.vmem [resolvable:$true] %s789
      %792 = dma.vmem_to_hbm [thread:$0]  %s790, 128, %s14, [#allocation12]
    $region77: #{forward.1} parent=1 // pred_fallthru
      _
    // Predicated region
    $region78: #{forward.1} parent=1 // pred_check
      _
    $region79: #{forward.1} parent=1 // pred_check_branch
      %794 = sbr.rel (0) target = $region81
    $region80: #{forward.1} parent=1 // pred_region
      _
    $region81: #{forward.1} parent=1 // pred_fallthru
      _
    // Predicated region
    $region82: #{forward.1} parent=1 // pred_check
      _
    $region83: #{forward.1} parent=1 // pred_check_branch
      %796 = sbr.rel (0) target = $region85
    $region84: #{forward.1} parent=1 // pred_region
      %797 = dma.done [#allocation4], 128
    $region85: #{forward.1} parent=1 // pred_fallthru
      _
    // Predicated region
    $region86: #{forward.1} parent=1 // pred_check
      _
    $region87: #{forward.1} parent=1 // pred_check_branch
      %799 = sbr.rel (0) target = $region89
    $region88: #{forward.1} parent=1 // pred_region
      %800 = dma.done [#allocation12], 128
    $region89: #{forward.1} parent=1 // pred_fallthru
      _
    // Predicated region
    $region90: #{forward.1} parent=1 // pred_check
      _
    $region91: #{forward.1} parent=1 // pred_check_branch
      %802 = sbr.rel (0) target = $region93
    $region92: #{forward.1} parent=1 // pred_region
      _
    $region93: #{forward.1} parent=1 // pred_fallthru
      _
    %803 = vsyncpa [#allocation3], 1
    %804 = vsyncpa [#allocation6], 1
    %805 = vsyncpa [#allocation9], 1
    %806 = vsyncpa [#allocation4], 1
    %807 = vsyncpa [#allocation12], 1

</llo_original>
